<compile_context>
chip_gen: v7x
topology: tpu7x:2x2x1
jax: 0.10.0
libtpu: 0.0.40
codegen_flags: <defaults>
</compile_context>

<pallas_src>
import functools
import math

import jax
import jax.numpy as jnp
from jax.experimental import pallas as pl
from jax.experimental.pallas import tpu as pltpu


def _round_up(x, m):
    return (x + m - 1) // m * m


def _label_smoothing_kernel(x_ref, tgt_ref, out_ref, acc_ref, *,
                            fill, confidence, padding_idx, row_entropy, tile_v):
    j = pl.program_id(1)            # vocab-tile index (reduction / accumulator axis)
    nj = pl.num_programs(1)

    x = x_ref[...].astype(jnp.float32)        # native-dtype DMA, f32 accumulate
    tgt = tgt_ref[...]                        # (TILE_N, 1) int32
    tn, tv = x.shape

    nonpad = tgt != padding_idx               # (TILE_N, 1) row mask

    # Initialize the scalar accumulator once per row tile with the entropy term.
    @pl.when(j == 0)
    def _():
        n_nonpad = jnp.sum(nonpad.astype(jnp.float32))
        acc_ref[...] = (row_entropy * n_nonpad).reshape(1, 1)

    # Single iota with global column ids, reused for both masked lane-reductions.
    col = jax.lax.broadcasted_iota(jnp.int32, (tn, tv), 1) + j * tile_v

    row_sum = jnp.sum(x, axis=-1, keepdims=True)                                    # sum_j x
    x_tgt = jnp.sum(jnp.where(col == tgt, x, 0.0), axis=-1, keepdims=True)          # x[i,tgt_i]
    x_pad = jnp.sum(jnp.where(col == padding_idx, x, 0.0), axis=-1, keepdims=True)  # x[i,pad]

    cross = fill * row_sum + (confidence - fill) * x_tgt - fill * x_pad
    cross = jnp.where(nonpad, cross, 0.0)     # padding-target rows contribute nothing
    acc_ref[...] -= jnp.sum(cross).reshape(1, 1)

    # Lane-dense writeback, once per row tile (on the last vocab tile).
    @pl.when(j == nj - 1)
    def _():
        out_ref[...] = jnp.broadcast_to(acc_ref[...], out_ref.shape)


def label_smoothing_loss(x, target, *, size, padding_idx, smoothing,
                         tile_n=None, tile_v=None):
    """x: (N, V) log-probs (f32/bf16); target: (N,) ints. Returns scalar f32 loss."""
    assert x.shape[1] == size
    n, v = x.shape

    fill = smoothing / (size - 2)
    confidence = 1.0 - smoothing
    # sum_j t*log(t) of one non-pad row, folded to a trace-time constant
    # (handles the 0*log0 = 0 convention at trace time).
    row_entropy = 0.0
    if fill > 0.0:
        row_entropy += (size - 2) * fill * math.log(fill)
    if confidence > 0.0:
        row_entropy += confidence * math.log(confidence)

    # Tile selection: lane-dense vocab tiles (multiple of 128), row tiles multiple
    # of 8.  Default 512x2048 f32 = 4 MiB/buffer -> 8 MiB double-buffered: safe
    # inside v7x's 64 MiB VMEM and big enough to sit near the HBM roofline on v5e/v6e.
    if tile_v is None:
        tile_v = min(2048, _round_up(v, 128))
    if tile_n is None:
        tile_n = min(512, _round_up(n, 8))
    assert tile_v % 128 == 0 and tile_n % 8 == 0

    n_pad = _round_up(n, tile_n)
    v_pad = _round_up(v, tile_v)

    # Pad: extra columns are zero (contribute 0 to every masked sum); extra rows
    # get target == padding_idx so the row mask zeroes them.
    if v_pad != v or n_pad != n:
        x = jnp.pad(x, ((0, n_pad - n), (0, v_pad - v)))
    tgt2d = target.astype(jnp.int32).reshape(n, 1)
    if n_pad != n:
        tgt2d = jnp.pad(tgt2d, ((0, n_pad - n), (0, 0)),
                        constant_values=padding_idx)

    grid = (n_pad // tile_n, v_pad // tile_v)

    kernel = functools.partial(
        _label_smoothing_kernel,
        fill=fill, confidence=confidence, padding_idx=padding_idx,
        row_entropy=row_entropy, tile_v=tile_v)

    partials = pl.pallas_call(
        kernel,
        out_shape=jax.ShapeDtypeStruct((grid[0], 8, 128), jnp.float32),
        grid=grid,
        in_specs=[
            pl.BlockSpec((tile_n, tile_v), lambda i, j: (i, j)),  # x in native dtype
            pl.BlockSpec((tile_n, 1), lambda i, j: (i, 0)),       # target ids
        ],
        out_specs=pl.BlockSpec((1, 8, 128), lambda i, j: (i, 0, 0)),
        scratch_shapes=[pltpu.VMEM((1, 1), jnp.float32)],
        compiler_params=pltpu.CompilerParams(
            dimension_semantics=("parallel", "arbitrary"),  # row tiles shard on v7x
            vmem_limit_bytes=32 << 20),
    )(x, tgt2d)

    # One partial per row tile (broadcast across its (8,128) block); final sum here.
    return jnp.sum(partials[:, 0, 0])


def label_smoothing_ref(x, target, *, size, padding_idx, smoothing):
    """Pure-JAX reference mirroring the PyTorch module (direct true_dist path)."""
    n, v = x.shape
    confidence = 1.0 - smoothing
    col = jnp.arange(v)[None, :]
    tgt = target.reshape(n, 1)
    td = jnp.full((n, v), smoothing / (size - 2), jnp.float32)
    td = jnp.where(col == tgt, confidence, td)
    td = jnp.where(col == padding_idx, 0.0, td)
    td = jnp.where(tgt == padding_idx, 0.0, td)
    safe = jnp.where(td > 0, td, 1.0)
    return jnp.sum(jnp.where(td > 0, td * (jnp.log(safe) - x), 0.0))


if __name__ == "__main__":
    SIZE = 256         # vocab size (x.size(1))
    N = 16             # flattened tokens
    PADDING_IDX = 0
    SMOOTHING = 0.1

    key = jax.random.PRNGKey(0)
    k_logits, k_tgt = jax.random.split(key)

    logits = jax.random.normal(k_logits, (N, SIZE), dtype=jnp.float32)
    x = jax.nn.log_softmax(logits, axis=-1)          # KLDivLoss expects log-probs
    target = jax.random.randint(k_tgt, (N,), 0, SIZE, dtype=jnp.int32)
    # force a couple of padding targets to exercise the row-zeroing path
    target = target.at[1].set(PADDING_IDX).at[5].set(PADDING_IDX)

    # f32 path with small explicit tiles -> (2, 2) grid exercises the accumulator.
    loss = label_smoothing_loss(x, target, size=SIZE, padding_idx=PADDING_IDX,
                                smoothing=SMOOTHING, tile_n=8, tile_v=128)
    jax.block_until_ready(loss)
    ref = label_smoothing_ref(x, target, size=SIZE, padding_idx=PADDING_IDX,
                              smoothing=SMOOTHING)
    assert jnp.allclose(loss, ref, rtol=1e-4, atol=1e-4), (loss, ref)

    # bf16 path: no wrapper-side upcast, kernel accumulates in f32.
    x_bf16 = x.astype(jnp.bfloat16)
    loss_bf16 = label_smoothing_loss(x_bf16, target, size=SIZE,
                                     padding_idx=PADDING_IDX, smoothing=SMOOTHING)
    jax.block_until_ready(loss_bf16)
    ref_bf16 = label_smoothing_ref(x_bf16.astype(jnp.float32), target, size=SIZE,
                                   padding_idx=PADDING_IDX, smoothing=SMOOTHING)
    assert jnp.allclose(loss_bf16, ref_bf16, rtol=1e-3, atol=1e-3), (loss_bf16, ref_bf16)

    print("KERNEL_OK")
</pallas_src>

<mosaic_0001>
module attributes {stable_mosaic.version = 11 : i64} {
  func.func @_label_smoothing_kernel(%arg0: i32, %arg1: i32, %arg2: memref<8x128xf32, #tpu.memory_space<vmem>>, %arg3: memref<8x1xi32, #tpu.memory_space<vmem>>, %arg4: memref<1x8x128xf32, #tpu.memory_space<vmem>>, %arg5: memref<1x1xf32, #tpu.memory_space<vmem>>) attributes {dimension_semantics = [#tpu.dimension_semantics<parallel>, #tpu.dimension_semantics<arbitrary>], iteration_bounds = array<i64: 2, 2>, scalar_prefetch = 0 : i64, scratch_operands = 1 : i64, tpu.core_type = #tpu.core_type<tc>, window_params = [{transform_indices = @transform_0, window_bounds = array<i64: 8, 128>}, {transform_indices = @transform_1, window_bounds = array<i64: 8, 1>}, {transform_indices = @transform_2, window_bounds = array<i64: 1, 8, 128>}]} {
    %c0 = arith.constant 0 : index
    %c0_0 = arith.constant 0 : index
    %0 = vector.load %arg2[%c0, %c0_0] : memref<8x128xf32, #tpu.memory_space<vmem>>, vector<8x128xf32>
    %c0_1 = arith.constant 0 : index
    %c0_2 = arith.constant 0 : index
    %1 = vector.load %arg3[%c0_1, %c0_2] : memref<8x1xi32, #tpu.memory_space<vmem>>, vector<8x1xi32>
    %c0_i32 = arith.constant 0 : i32
    %2 = vector.broadcast %c0_i32 : i32 to vector<8x1xi32>
    %3 = arith.cmpi ne, %1, %2 : vector<8x1xi32>
    %c0_i32_3 = arith.constant 0 : i32
    %4 = arith.cmpi eq, %arg1, %c0_i32_3 : i32
    %5 = arith.extui %4 : i1 to i32
    %c0_i32_4 = arith.constant 0 : i32
    %6 = arith.cmpi ne, %5, %c0_i32_4 : i32
    scf.if %6 {
      %46 = arith.extui %3 : vector<8x1xi1> to vector<8x1xi32>
      %47 = arith.sitofp %46 : vector<8x1xi32> to vector<8x1xf32>
      %48 = vector.shape_cast %47 : vector<8x1xf32> to vector<1x8x1xf32>
      %cst_20 = arith.constant dense<0.000000e+00> : vector<1xf32>
      %49 = vector.multi_reduction <add>, %48, %cst_20 [1, 2] : vector<1x8x1xf32> to vector<1xf32>
      %50 = vector.shape_cast %49 : vector<1xf32> to vector<1x1x1xf32>
      %51 = vector.extract %50[0, 0, 0] : f32 from vector<1x1x1xf32>
      %cst_21 = arith.constant -0.878816425 : f32
      %52 = arith.mulf %cst_21, %51 : f32
      %53 = vector.broadcast %52 : f32 to vector<1x1xf32>
      %c0_22 = arith.constant 0 : index
      %c0_23 = arith.constant 0 : index
      %54 = vector.load %arg5[%c0_22, %c0_23] : memref<1x1xf32, #tpu.memory_space<vmem>>, vector<1x1xf32>
      tpu.vector_store %arg5[%c0_22, %c0_23], %53 {strides = array<i32>} : memref<1x1xf32, #tpu.memory_space<vmem>>, vector<1x1xf32>,
    } else {
    }
    %7 = tpu.iota {dimensions = array<i32: 1>} : vector<8x128xi32>
    %c128_i32 = arith.constant 128 : i32
    %8 = arith.muli %arg1, %c128_i32 : i32
    %9 = vector.broadcast %8 : i32 to vector<8x128xi32>
    %10 = arith.addi %7, %9 : vector<8x128xi32>
    %cst = arith.constant dense<0.000000e+00> : vector<8xf32>
    %11 = vector.multi_reduction <add>, %0, %cst [1] : vector<8x128xf32> to vector<8xf32>
    %12 = vector.shape_cast %11 : vector<8xf32> to vector<8x1xf32>
    %13 = vector.broadcast %1 : vector<8x1xi32> to vector<8x128xi32>
    %14 = arith.cmpi eq, %10, %13 : vector<8x128xi32>
    %cst_5 = arith.constant 0.000000e+00 : f32
    %15 = vector.broadcast %cst_5 : f32 to vector<8x128xf32>
    %16 = arith.select %14, %0, %15 : vector<8x128xi1>, vector<8x128xf32>
    %cst_6 = arith.constant dense<0.000000e+00> : vector<8xf32>
    %17 = vector.multi_reduction <add>, %16, %cst_6 [1] : vector<8x128xf32> to vector<8xf32>
    %18 = vector.shape_cast %17 : vector<8xf32> to vector<8x1xf32>
    %c0_i32_7 = arith.constant 0 : i32
    %19 = vector.broadcast %c0_i32_7 : i32 to vector<8x128xi32>
    %20 = arith.cmpi eq, %10, %19 : vector<8x128xi32>
    %cst_8 = arith.constant 0.000000e+00 : f32
    %21 = vector.broadcast %cst_8 : f32 to vector<8x128xf32>
    %22 = arith.select %20, %0, %21 : vector<8x128xi1>, vector<8x128xf32>
    %cst_9 = arith.constant dense<0.000000e+00> : vector<8xf32>
    %23 = vector.multi_reduction <add>, %22, %cst_9 [1] : vector<8x128xf32> to vector<8xf32>
    %24 = vector.shape_cast %23 : vector<8xf32> to vector<8x1xf32>
    %cst_10 = arith.constant 3.93700786E-4 : f32
    %25 = vector.broadcast %cst_10 : f32 to vector<8x1xf32>
    %26 = arith.mulf %25, %12 : vector<8x1xf32>
    %cst_11 = arith.constant 0.899606287 : f32
    %27 = vector.broadcast %cst_11 : f32 to vector<8x1xf32>
    %28 = arith.mulf %27, %18 : vector<8x1xf32>
    %29 = arith.addf %26, %28 : vector<8x1xf32>
    %cst_12 = arith.constant 3.93700786E-4 : f32
    %30 = vector.broadcast %cst_12 : f32 to vector<8x1xf32>
    %31 = arith.mulf %30, %24 : vector<8x1xf32>
    %32 = arith.subf %29, %31 : vector<8x1xf32>
    %cst_13 = arith.constant 0.000000e+00 : f32
    %33 = vector.broadcast %cst_13 : f32 to vector<8x1xf32>
    %34 = arith.select %3, %32, %33 : vector<8x1xi1>, vector<8x1xf32>
    %c0_14 = arith.constant 0 : index
    %c0_15 = arith.constant 0 : index
    %35 = vector.load %arg5[%c0_14, %c0_15] : memref<1x1xf32, #tpu.memory_space<vmem>>, vector<1x1xf32>
    %36 = vector.shape_cast %34 : vector<8x1xf32> to vector<1x8x1xf32>
    %cst_16 = arith.constant dense<0.000000e+00> : vector<1xf32>
    %37 = vector.multi_reduction <add>, %36, %cst_16 [1, 2] : vector<1x8x1xf32> to vector<1xf32>
    %38 = vector.shape_cast %37 : vector<1xf32> to vector<1x1x1xf32>
    %39 = vector.extract %38[0, 0, 0] : f32 from vector<1x1x1xf32>
    %40 = vector.broadcast %39 : f32 to vector<1x1xf32>
    %41 = arith.subf %35, %40 : vector<1x1xf32>
    %c0_17 = arith.constant 0 : index
    %c0_18 = arith.constant 0 : index
    %42 = vector.load %arg5[%c0_17, %c0_18] : memref<1x1xf32, #tpu.memory_space<vmem>>, vector<1x1xf32>
    tpu.vector_store %arg5[%c0_17, %c0_18], %41 {strides = array<i32>} : memref<1x1xf32, #tpu.memory_space<vmem>>, vector<1x1xf32>,
    %c1_i32 = arith.constant 1 : i32
    %43 = arith.cmpi eq, %arg1, %c1_i32 : i32
    %44 = arith.extui %43 : i1 to i32
    %c0_i32_19 = arith.constant 0 : i32
    %45 = arith.cmpi ne, %44, %c0_i32_19 : i32
    scf.if %45 {
      %c0_20 = arith.constant 0 : index
      %c0_21 = arith.constant 0 : index
      %46 = vector.load %arg5[%c0_20, %c0_21] : memref<1x1xf32, #tpu.memory_space<vmem>>, vector<1x1xf32>
      %47 = vector.shape_cast %46 : vector<1x1xf32> to vector<1x1x1xf32>
      %48 = vector.broadcast %47 : vector<1x1x1xf32> to vector<1x8x128xf32>
      %c0_22 = arith.constant 0 : index
      %c0_23 = arith.constant 0 : index
      %c0_24 = arith.constant 0 : index
      %49 = vector.load %arg4[%c0_22, %c0_23, %c0_24] : memref<1x8x128xf32, #tpu.memory_space<vmem>>, vector<1x8x128xf32>
      tpu.vector_store %arg4[%c0_22, %c0_23, %c0_24], %48 {strides = array<i32>} : memref<1x8x128xf32, #tpu.memory_space<vmem>>, vector<1x8x128xf32>,
    } else {
    }
    return
  }
  func.func @transform_0(%arg0: i32, %arg1: i32) -> (i32, i32) {
    %c0_i32 = arith.constant 0 : i32
    return %arg0, %arg1 : i32, i32
  }
  func.func @transform_1(%arg0: i32, %arg1: i32) -> (i32, i32) {
    %c0_i32 = arith.constant 0 : i32
    %c0_i32_0 = arith.constant 0 : i32
    return %arg0, %c0_i32 : i32, i32
  }
  func.func @transform_2(%arg0: i32, %arg1: i32) -> (i32, i32, i32) {
    %c0_i32 = arith.constant 0 : i32
    %c0_i32_0 = arith.constant 0 : i32
    %c0_i32_1 = arith.constant 0 : i32
    return %arg0, %c0_i32, %c0_i32_0 : i32, i32, i32
  }
}

</mosaic_0001>

<llo_original>
// kernel: tpu_custom_call.1
$region0: #{tpu_custom_call.1}
  #allocation0 [shape = 'u32[]', space=smem, size = 0x4, offset = 0x4, fixed_abs, tag = 'smem constant byte address 0x4 - core index']
  #allocation1 [shape = 'u32[144,128]{1,0:T(1,128)}', space=vmem, size = 0x12000, scoped, tag = 'internal scratch']
  #allocation2 [shape = 'f32[1,1]{1,0:T(1,128)}', space=vmem, size = 0x200, scoped, tag = 'scratch operand']
  %s0 = inlined_call_operand.hbm [shape: f32[16,256], index: 0, kind: input, shape index: {}]
  %s1 = inlined_call_operand.vmem [shape: s32[16,1], index: 1, kind: input, shape index: {}]
  %s2 = inlined_call_operand.hbm [shape: f32[2,8,128], index: 2, kind: output, shape index: {}]
  %s3 = sld [smem:[#allocation0]]
  $region53: #{tpu_custom_call.1} parent=0
    _
  %s5 = ssub.s32 1, %s3
  %s6 = scalar_select 0, %s5, %s3
  $region1: #{tpu_custom_call.1} parent=0
    #allocation3 [shape = 'u8[8192]{0}', space=vmem, size = 0x2000, scoped, tag = 'input window, operand 0']
    #allocation4 [shape = 's32[2]{0}', space=sflag, size = 0x8, scoped, tag = 'scoped memory for tpu_custom_call.1']
    #allocation5 [shape = 's32[2]{0}', space=sflag, size = 0x8, scoped, tag = 'scoped memory for tpu_custom_call.1']
    #allocation6 [shape = 'u8[8192]{0}', space=vmem, size = 0x2000, scoped, tag = 'output window, operand 0']
    %7 = vsyncpa [#allocation4], 0
    %s8 = scalar_lea.sflag [#allocation4], 1
    %9 = vsyncpa %s8, 0
    %10 = vsyncpa [#allocation5], 0
    %s11 = scalar_lea.sflag [#allocation5], 1
    %12 = vsyncpa %s11, 0
    loop: start=0, step=1, limit=6
    $region2: #{tpu_custom_call.1} parent=1 // loop_pre_header
      _
    $region3: #{tpu_custom_call.1} parent=1 // loop_header
      %s14 = sphi 0, %s18
      %p15 = scmp.ge.s32.totalorder %s14, 6
      %s21 = sphi 0, %s33
      %s22 = sphi 0, %s29
      %s23 = sphi 0, %s21
      %s24 = sphi 0, %s22
      %s25 = sphi 0, %s23
      %s26 = sphi 0, %s24
      %s38 = sphi 0, %s40
      %s41 = sphi 0, %s38
      %s42 = sphi 0, %s41
      %s58 = sphi 0, %s42
      %s64 = sphi 0, %s66
      %s67 = sphi 0, %s64
      %s68 = sphi 0, %s67
      %s84 = sphi 0, %s68
      %s90 = sphi 0, %s92
      %s93 = sphi 0, %s90
      %s94 = sphi 0, %s93
      %s110 = sphi 0, %s94
    $region4: #{tpu_custom_call.1} parent=1 // loop_header_branch
      %17 = sbr.rel (%p15) target = $region8
    $region5: #{tpu_custom_call.1} parent=1 // loop_body
      %s19 = ssub.s32 %s14, 1
      %s20 = ssub.s32 %s14, 2
      %s27 = sadd.s32 1, %s22
      %p28 = scmp.ge.s32.totalorder %s27, 2
      %s29 = scalar_select %p28, 0, %s27
      %s30 = sadd.s32 1, %s21
      %s31 = scalar_select %p28, %s30, %s21
      %p32 = scmp.ge.s32.totalorder %s31, 2
      %s33 = scalar_select %p32, 0, %s31
      %s34 = ssub.s32 %s21, %s33
      %s35 = ssub.s32 %s22, %s29
      %s36 = sor.u32 %s34, %s35
      %p37 = scmp.eq.s32.totalorder %s36, 0
      %s39 = sadd.s32 %s38, 1
      %s40 = scalar_select %p37, %s38, %s39
      %p43 = pneg %p37
      %p44 = scmp.eq.s32.totalorder %s14, 3
      %p45 = por %p43, %p44
      %p46 = scmp.ne.s32.totalorder %s38, %s41
      %p47 = scmp.eq.s32.totalorder %s14, 0
      %p48 = por %p46, %p47
      %p49 = scmp.ne.s32.totalorder %s38, %s41
      %p50 = scmp.eq.s32.totalorder %s19, 3
      %p51 = por %p49, %p50
      %p52 = scmp.ne.s32.totalorder %s41, %s42
      %p53 = scmp.eq.s32.totalorder %s19, 0
      %p54 = por %p52, %p53
      %p55 = scmp.ne.s32.totalorder %s41, %s42
      %p56 = scmp.eq.s32.totalorder %s20, 3
      %p57 = por %p55, %p56
      %p59 = scmp.ne.s32.totalorder %s42, %s58
      %p60 = scmp.eq.s32.totalorder %s20, 0
      %p61 = por %p59, %p60
      %s62 = ssub.s32 %s21, %s33
      %p63 = scmp.eq.s32.totalorder %s62, 0
      %s65 = sadd.s32 %s64, 1
      %s66 = scalar_select %p63, %s64, %s65
      %p69 = pneg %p63
      %p70 = scmp.eq.s32.totalorder %s14, 3
      %p71 = por %p69, %p70
      %p72 = scmp.ne.s32.totalorder %s64, %s67
      %p73 = scmp.eq.s32.totalorder %s14, 0
      %p74 = por %p72, %p73
      %p75 = scmp.ne.s32.totalorder %s64, %s67
      %p76 = scmp.eq.s32.totalorder %s19, 3
      %p77 = por %p75, %p76
      %p78 = scmp.ne.s32.totalorder %s67, %s68
      %p79 = scmp.eq.s32.totalorder %s19, 0
      %p80 = por %p78, %p79
      %p81 = scmp.ne.s32.totalorder %s67, %s68
      %p82 = scmp.eq.s32.totalorder %s20, 3
      %p83 = por %p81, %p82
      %p85 = scmp.ne.s32.totalorder %s68, %s84
      %p86 = scmp.eq.s32.totalorder %s20, 0
      %p87 = por %p85, %p86
      %s88 = ssub.s32 %s21, %s33
      %p89 = scmp.eq.s32.totalorder %s88, 0
      %s91 = sadd.s32 %s90, 1
      %s92 = scalar_select %p89, %s90, %s91
      %p95 = pneg %p89
      %p96 = scmp.eq.s32.totalorder %s14, 3
      %p97 = por %p95, %p96
      %p98 = scmp.ne.s32.totalorder %s90, %s93
      %p99 = scmp.eq.s32.totalorder %s14, 0
      %p100 = por %p98, %p99
      %p101 = scmp.ne.s32.totalorder %s90, %s93
      %p102 = scmp.eq.s32.totalorder %s19, 3
      %p103 = por %p101, %p102
      %p104 = scmp.ne.s32.totalorder %s93, %s94
      %p105 = scmp.eq.s32.totalorder %s19, 0
      %p106 = por %p104, %p105
      %p107 = scmp.ne.s32.totalorder %s93, %s94
      %p108 = scmp.eq.s32.totalorder %s20, 3
      %p109 = por %p107, %p108
      %p111 = scmp.ne.s32.totalorder %s94, %s110
      %p112 = scmp.eq.s32.totalorder %s20, 0
      %p113 = por %p111, %p112
      %p114 = scmp.le.s32.totalorder 1, %s14
      %p115 = scmp.lt.s32.totalorder %s14, 5
      %p116 = pnand %p114, %p115
      %p117 = pneg %p116
      // Predicated region
      $region9: #{tpu_custom_call.1} parent=5 // pred_check
        _
      $region10: #{tpu_custom_call.1} parent=5 // pred_check_branch
        %119 = sbr.rel (%p116) target = $region12
      $region11: #{tpu_custom_call.1} parent=5 // pred_region
        %s120 = ssub.s32 %s14, 1
      $region12: #{tpu_custom_call.1} parent=5 // pred_fallthru
        _
      %p121 = scmp.lt.s32.totalorder %s14, 4
      // Predicated region
      $region13: #{tpu_custom_call.1} parent=5 // pred_check
        %p122 = pneg %p121
      $region14: #{tpu_custom_call.1} parent=5 // pred_check_branch
        %124 = sbr.rel (%p122) target = $region16
      $region15: #{tpu_custom_call.1} parent=5 // pred_region
        // Predicated region
        $region17: #{tpu_custom_call.1} parent=15 // pred_check
          %p125 = pneg %p48
        $region18: #{tpu_custom_call.1} parent=15 // pred_check_branch
          %127 = sbr.rel (%p125) target = $region20
        $region19: #{tpu_custom_call.1} parent=15 // pred_region
          %s128 = sand.u32 %s38, 1
          %s129 = scalar_lea.sflag [#allocation4], %s128
          %s130 = sand.u32 %s38, 1
          %s131 = smul.addr %s130, 8
          %s132 = scalar_lea.vmem [#allocation3], %s131
          %s134 = ssub.s32 128, 128
          %135 = vsyncadd %s129, %s134
          %s136 = smul.addr %s21, 2
          %s137 = sadd.s32 %s22, %s136
          %s138 = smul.addr %s137, 128
          %s139 = scalar_lea.hbm %s0, %s138
          %s141 = sshll.u32 %s132, 4
          %s142 = int_to_ptr.vmem [resolvable:$true] %s141
          %144 = dma.hbm_to_vmem [thread:$0]  %s139, 128, %s142, %s129
        $region20: #{tpu_custom_call.1} parent=15 // pred_fallthru
          _
        // Predicated region
        $region21: #{tpu_custom_call.1} parent=15 // pred_check
          %p145 = pneg %p74
        $region22: #{tpu_custom_call.1} parent=15 // pred_check_branch
          %147 = sbr.rel (%p145) target = $region24
        $region23: #{tpu_custom_call.1} parent=15 // pred_region
          %p148 = scmp.lt.s32.totalorder %s21, 1
          %s149 = scalar_select %p148, %s21, 1
          %s150 = smul.addr %s149, 8
          %s151 = scalar_lea.vmem %s1, %s150
        $region24: #{tpu_custom_call.1} parent=15 // pred_fallthru
          _
      $region16: #{tpu_custom_call.1} parent=5 // pred_fallthru
        _
      %p152 = scmp.le.s32.totalorder 1, %s14
      %p153 = scmp.lt.s32.totalorder %s14, 5
      %p154 = pnand %p152, %p153
      %p155 = pneg %p154
      // Predicated region
      $region25: #{tpu_custom_call.1} parent=5 // pred_check
        _
      $region26: #{tpu_custom_call.1} parent=5 // pred_check_branch
        %157 = sbr.rel (%p154) target = $region28
      $region27: #{tpu_custom_call.1} parent=5 // pred_region
        %s158 = ssub.s32 %s14, 1
        %s159 = sand.u32 %s41, 1
        %s160 = scalar_lea.sflag [#allocation4], %s159
        %s161 = sand.u32 %s41, 1
        %s162 = smul.addr %s161, 8
        %s163 = scalar_lea.vmem [#allocation3], %s162
        // Predicated region
        $region29: #{tpu_custom_call.1} parent=27 // pred_check
          %p164 = pneg %p54
        $region30: #{tpu_custom_call.1} parent=27 // pred_check_branch
          %166 = sbr.rel (%p164) target = $region32
        $region31: #{tpu_custom_call.1} parent=27 // pred_region
          %167 = dma.done %s160, 128
        $region32: #{tpu_custom_call.1} parent=27 // pred_fallthru
          _
        %s168 = sand.u32 %s41, 1
        %s169 = scalar_lea.sflag [#allocation4], %s168
        %s170 = sand.u32 %s41, 1
        %s171 = smul.addr %s170, 8
        %s172 = scalar_lea.vmem [#allocation3], %s171
        %p173 = pneg %p54
        %p174 = pneg %p51
        %p175 = scmp.lt.s32.totalorder %s23, 1
        %s176 = scalar_select %p175, %s23, 1
        %s177 = smul.addr %s176, 8
        %s178 = scalar_lea.vmem %s1, %s177
        %p179 = pneg %p80
        %p180 = pneg %p77
        %p181 = pneg %p106
        %p182 = pneg %p103
        %s183 = sand.u32 %s93, 1
        %s184 = scalar_lea.sflag [#allocation5], %s183
        %s185 = sand.u32 %s93, 1
        %s186 = smul.addr %s185, 8
        %s187 = scalar_lea.vmem [#allocation6], %s186
        %p188 = scmp.lt.s32.totalorder %s23, 1
        %s189 = scalar_select %p188, %s23, 1
        %s190 = smul.addr %s189, 8
        %s191 = scalar_lea.vmem %s1, %s190
        %v192 = vld [vmem:[%s163] sm:$0xff]
        %v193 = vld [vmem:[%s191] sm:$0xff]
        %vm194 = vcmp.ne.s32.totalorder %v193, 0
        %p195 = scmp.eq.s32.totalorder %s24, 0
        // Predicated region
        $region33: #{tpu_custom_call.1} parent=27 // pred_check
          %p196 = pneg %p195
        $region34: #{tpu_custom_call.1} parent=27 // pred_check_branch
          %198 = sbr.rel (%p196) target = $region36
        $region35: #{tpu_custom_call.1} parent=27 // pred_region
          %v199 = vsel %vm194, 1, 0
          %v200 = vcvt.s32.f32 %v199
          %vm201 = vcmask 7168
          %v202 = vsel %vm201, %v200, 0.0
          %203 = vadd.xlane.f32.xlu0 %v202
          %v204 = vpop.xlane.xlu0 %203
          %v205 = vrot.slane %v204, 4
          %v206 = vadd.f32 %v204, %v205
          %v207 = vrot.slane %v206, 2
          %v208 = vadd.f32 %v206, %v207
          %v209 = vrot.slane %v208, 1
          %v210 = vadd.f32 %v208, %v209
          %s211 = vtos %v210
          %s212 = smul.f32 %s211, -0.8788164
          %v213 = vstv %s212
          %vm214 = vcmask 0
          %215 = vst.msk [vmem:[#allocation2] sm:$0x1] %vm214, %v213
        $region36: #{tpu_custom_call.1} parent=27 // pred_fallthru
          _
        %v216 = vlaneseq
        %v217 = vand.u32 %v216, 127
        %s218 = smul.u32 %s24, 128
        %v219 = vstv %s218
        %v220 = vadd.s32 %v217, %v219
        %221 = vadd.xlane.f32.xlu0 %v192
        %v222 = vpop.xlane.xlu0 %221
        %223 = vset.pattern.permute.xlu0 0
        %224 = vperm.xlu0 %223, %v193
        %v225 = vpop.permute.xlu0 %224
        %vm226 = vcmp.eq.s32.totalorder %v220, %v225
        %v227 = vsel %vm226, %v192, 0.0
        %228 = vadd.xlane.f32.xlu0 %v227
        %v229 = vpop.xlane.xlu0 %228
        %vm230 = vcmp.eq.s32.totalorder %v220, 0
        %v231 = vsel %vm230, %v192, 0.0
        %232 = vadd.xlane.f32.xlu0 %v231
        %v233 = vpop.xlane.xlu0 %232
        %v234 = vmul.f32 %v222, 0.0003937008
        %v235 = vmul.f32 %v229, 0.8996063
        %v236 = vadd.f32 %v234, %v235
        %v237 = vmul.f32 %v233, 0.0003937008
        %v238 = vsub.f32 %v236, %v237
        %v239 = vsel %vm194, %v238, 0.0
        %v240 = vld [vmem:[#allocation2] sm:$0x1]
        %vm241 = vcmask 7168
        %v242 = vsel %vm241, %v239, 0.0
        %243 = vadd.xlane.f32.xlu0 %v242
        %v244 = vpop.xlane.xlu0 %243
        %v245 = vrot.slane %v244, 4
        %v246 = vadd.f32 %v244, %v245
        %v247 = vrot.slane %v246, 2
        %v248 = vadd.f32 %v246, %v247
        %v249 = vrot.slane %v248, 1
        %v250 = vadd.f32 %v248, %v249
        %s251 = vtos %v250
        %v252 = vstv %s251
        %v253 = vsub.f32 %v240, %v252
        %vm254 = vcmask 0
        %255 = vst.msk [vmem:[#allocation2] sm:$0x1] %vm254, %v253
        %p256 = scmp.eq.s32.totalorder %s24, 1
        // Predicated region
        $region37: #{tpu_custom_call.1} parent=27 // pred_check
          %p257 = pneg %p256
        $region38: #{tpu_custom_call.1} parent=27 // pred_check_branch
          %259 = sbr.rel (%p257) target = $region40
        $region39: #{tpu_custom_call.1} parent=27 // pred_region
          %v260 = vld [vmem:[#allocation2] sm:$0x1]
          %v262 = vlaneseq
          %v263 = vshrl.u32 %v262, 7
          %v264 = vsub.s32 0, %v263
          %v265 = vrot.slane %v260, %v264
          %266 = vset.pattern.permute.xlu0 0
          %267 = vperm.xlu0 %266, %v265
          %v268 = vpop.permute.xlu0 %267
          %270 = vst [vmem:[%s187] sm:$0xff] %v268
        $region40: #{tpu_custom_call.1} parent=27 // pred_fallthru
          _
        %s271 = sand.u32 %s93, 1
        %s272 = scalar_lea.sflag [#allocation5], %s271
        %s273 = sand.u32 %s93, 1
        %s274 = smul.addr %s273, 8
        %s275 = scalar_lea.vmem [#allocation6], %s274
        // Predicated region
        $region41: #{tpu_custom_call.1} parent=27 // pred_check
          %p276 = pneg %p103
        $region42: #{tpu_custom_call.1} parent=27 // pred_check_branch
          %278 = sbr.rel (%p276) target = $region44
        $region43: #{tpu_custom_call.1} parent=27 // pred_region
          %s280 = ssub.s32 128, 128
          %281 = vsyncadd %s272, %s280
          %s282 = smul.addr %s23, 128
          %s283 = scalar_lea.hbm %s2, %s282
          %s285 = sshll.u32 %s275, 4
          %s286 = int_to_ptr.vmem [resolvable:$true] %s285
          %288 = dma.vmem_to_hbm [thread:$0]  %s286, 128, %s283, %s272
        $region44: #{tpu_custom_call.1} parent=27 // pred_fallthru
          _
      $region28: #{tpu_custom_call.1} parent=5 // pred_fallthru
        _
      %p289 = scmp.le.s32.totalorder 2, %s14
      // Predicated region
      $region45: #{tpu_custom_call.1} parent=5 // pred_check
        %p290 = pneg %p289
      $region46: #{tpu_custom_call.1} parent=5 // pred_check_branch
        %292 = sbr.rel (%p290) target = $region48
      $region47: #{tpu_custom_call.1} parent=5 // pred_region
        %s293 = ssub.s32 %s14, 2
        // Predicated region
        $region49: #{tpu_custom_call.1} parent=47 // pred_check
          %p294 = pneg %p109
        $region50: #{tpu_custom_call.1} parent=47 // pred_check_branch
          %296 = sbr.rel (%p294) target = $region52
        $region51: #{tpu_custom_call.1} parent=47 // pred_region
          %s297 = sand.u32 %s94, 1
          %s298 = scalar_lea.sflag [#allocation5], %s297
          %s299 = sand.u32 %s94, 1
          %s300 = smul.addr %s299, 8
          %s301 = scalar_lea.vmem [#allocation6], %s300
          %302 = dma.done %s298, 128
        $region52: #{tpu_custom_call.1} parent=47 // pred_fallthru
          _
      $region48: #{tpu_custom_call.1} parent=5 // pred_fallthru
        _
    $region6: #{tpu_custom_call.1} parent=1 // loop_footer
      %s18 = sadd.s32 1, %s14
    $region7: #{tpu_custom_call.1} parent=1 // loop_footer_branch
      %13 = sbr.rel target = $region3
    $region8: #{tpu_custom_call.1} parent=1 // loop_exit
      _
    %303 = vsyncpa [#allocation4], 1
    %s304 = scalar_lea.sflag [#allocation4], 1
    %305 = vsyncpa %s304, 1
    %306 = vsyncpa [#allocation5], 1
    %s307 = scalar_lea.sflag [#allocation5], 1
    %308 = vsyncpa %s307, 1

</llo_original>
